<compile_context>
chip_gen: v7x
topology: tpu7x:2x2x1
jax: 0.10.0
libtpu: 0.0.40
codegen_flags: <defaults>
</compile_context>

<pallas_src>
import math
import numpy as np
import jax
import jax.numpy as jnp
from jax import lax
from jax.experimental import pallas as pl
from jax.experimental.pallas import tpu as pltpu


# -----------------------------------------------------------------------------
# helpers
# -----------------------------------------------------------------------------
def _pick_tile(dim, desired, align):
    """Largest tile <= desired that divides `dim` and is a multiple of `align`.
    Falls back to the full dim (always legal) only if no aligned divisor exists."""
    if dim <= desired:
        return dim
    t = (min(desired, dim) // align) * align
    while t >= align:
        if dim % t == 0:
            return t
        t -= align
    return dim


def _pick_row_tile(H, W, ck, budget_bytes=4 * 1024 * 1024):
    """Rows per fused-conv tile so ~5 fp32 slabs of (th+2, W, ck) stay within a few
    MiB (kept modest so the same config also fits v7x's 64 MiB physical VMEM)."""
    per_row = W * ck * 4 * 5
    th = max(1, min(H, budget_bytes // per_row))
    while th > 1 and not (H % th == 0 and (th * W) % 8 == 0):
        th -= 1
    if not (H % th == 0 and ((th * W) % 8 == 0 or th == H)):
        th = H
    return th


# -----------------------------------------------------------------------------
# Kernel 1: tiled Linear  (out = x @ W + b)
#   - K fits in one tile  -> no accumulator scratch, single dot + bias + store
#   - K tiled             -> fp32 VMEM accumulator, zero at k==0, finalize at last k
# Operands are cast to `compute_dtype` in-kernel (no wrapper-side cast pass).
# -----------------------------------------------------------------------------
def _make_linear_kernel_noacc(compute_dtype):
    def kernel(x_ref, w_ref, b_ref, o_ref):
        a = x_ref[...].astype(compute_dtype)
        y = jnp.dot(a, w_ref[...], preferred_element_type=jnp.float32)
        o_ref[...] = (y + b_ref[...]).astype(o_ref.dtype)
    return kernel


def _make_linear_kernel_acc(compute_dtype):
    def kernel(x_ref, w_ref, b_ref, o_ref, acc_ref):
        k = pl.program_id(2)

        @pl.when(k == 0)
        def _():
            acc_ref[...] = jnp.zeros_like(acc_ref)

        a = x_ref[...].astype(compute_dtype)
        acc_ref[...] += jnp.dot(a, w_ref[...], preferred_element_type=jnp.float32)

        @pl.when(k == pl.num_programs(2) - 1)
        def _():
            o_ref[...] = (acc_ref[...] + b_ref[...]).astype(o_ref.dtype)
    return kernel


def linear_pallas(x, w, b, *, out_dtype=None, compute_dtype=None,
                  tm=512, tn=512, tk=512):
    """x: (M, K), w: (K, N), b: (N,)."""
    M, K = x.shape
    K2, N = w.shape
    assert K == K2
    out_dtype = out_dtype if out_dtype is not None else x.dtype
    compute_dtype = compute_dtype if compute_dtype is not None else x.dtype
    if w.dtype != compute_dtype:
        w = w.astype(compute_dtype)          # weights: cast once (store bf16 in practice)
    b2 = b.reshape(1, N).astype(jnp.float32)

    tm = _pick_tile(M, tm, 8)
    if M // tm < 2 and M >= 16:              # keep >=2 parallel M steps (v7x megacore)
        tm = _pick_tile(M, max(8, tm // 2), 8)
    tn = _pick_tile(N, tn, 128)
    tk = _pick_tile(K, tk, 128)
    gm, gn, gk = M // tm, N // tn, K // tk

    if gk == 1:                              # fast path: no accumulator round trip
        return pl.pallas_call(
            _make_linear_kernel_noacc(compute_dtype),
            out_shape=jax.ShapeDtypeStruct((M, N), out_dtype),
            grid_spec=pltpu.PrefetchScalarGridSpec(
                num_scalar_prefetch=0,
                grid=(gm, gn),
                in_specs=[
                    pl.BlockSpec((tm, K), lambda i, j: (i, 0)),
                    pl.BlockSpec((K, tn), lambda i, j: (0, j)),
                    pl.BlockSpec((1, tn), lambda i, j: (0, j)),
                ],
                out_specs=pl.BlockSpec((tm, tn), lambda i, j: (i, j)),
            ),
            compiler_params=pltpu.CompilerParams(
                dimension_semantics=("parallel", "parallel"),
                vmem_limit_bytes=48 * 1024 * 1024,
            ),
        )(x, w, b2)

    return pl.pallas_call(
        _make_linear_kernel_acc(compute_dtype),
        out_shape=jax.ShapeDtypeStruct((M, N), out_dtype),
        grid_spec=pltpu.PrefetchScalarGridSpec(
            num_scalar_prefetch=0,
            grid=(gm, gn, gk),
            in_specs=[
                pl.BlockSpec((tm, tk), lambda i, j, k: (i, k)),
                pl.BlockSpec((tk, tn), lambda i, j, k: (k, j)),
                pl.BlockSpec((1, tn), lambda i, j, k: (0, j)),
            ],
            out_specs=pl.BlockSpec((tm, tn), lambda i, j, k: (i, j)),
            scratch_shapes=[pltpu.VMEM((tm, tn), jnp.float32)],
        ),
        compiler_params=pltpu.CompilerParams(
            dimension_semantics=("parallel", "parallel", "arbitrary"),
            vmem_limit_bytes=48 * 1024 * 1024,
        ),
    )(x, w, b2)


# -----------------------------------------------------------------------------
# Kernel 2 (fused): 3x3 depthwise conv (stride 1, pad 1) + bias + exact GELU
#                   + fc2 matmul (+ bias), NHWC, row-tiled with in-kernel halo
#                   handling.  The post-GELU hidden never leaves VMEM.
#   grid = (B, H//th, out/tn, hidden/ck) ; k (hidden-channel) is the reduction.
# -----------------------------------------------------------------------------
def _make_fused_kernel(th, W, compute_dtype):
    inv_sqrt2 = 1.0 / math.sqrt(2.0)

    def kernel(h_ref, top_ref, bot_ref, dww_ref, dwb_ref, w2_ref, b2_ref,
               o_ref, acc_ref):
        hi = pl.program_id(1)
        k = pl.program_id(3)

        @pl.when(k == 0)
        def _():
            acc_ref[...] = jnp.zeros_like(acc_ref)

        f32 = jnp.float32
        main = h_ref[...].astype(f32)                       # (1, th, W, ck)
        # Halo rows: index_map clamped them at the image border; zero them there.
        top = top_ref[...].astype(f32) * jnp.where(hi == 0, 0.0, 1.0)
        bot = bot_ref[...].astype(f32) * jnp.where(hi == pl.num_programs(1) - 1, 0.0, 1.0)

        slab = jnp.concatenate([top, main, bot], axis=1)    # (1, th+2, W, ck)
        ck = main.shape[-1]

        # Column-edge mask built once at (1, 1, W, ck), reused for both rolls.
        col = lax.broadcasted_iota(jnp.int32, (1, 1, W, ck), 2)
        not_first_col = (col > 0).astype(f32)
        not_last_col = (col < W - 1).astype(f32)

        # dx = -1 / +1 taps: one XLU roll per direction on the slab + small mask.
        slab_l = pltpu.roll(slab, shift=1, axis=2) * not_first_col     # value at col c-1
        slab_r = pltpu.roll(slab, shift=W - 1, axis=2) * not_last_col  # value at col c+1

        w = dww_ref[...].astype(f32)                        # (3, 3, ck)
        conv = jnp.zeros_like(main)                         # (1, th, W, ck) fp32
        for dy in range(3):                                 # leading-dim slices (cheap)
            conv = conv + slab_l[:, dy:dy + th] * w[dy, 0]
            conv = conv + slab[:, dy:dy + th] * w[dy, 1]
            conv = conv + slab_r[:, dy:dy + th] * w[dy, 2]
        conv = conv + dwb_ref[...].astype(f32)              # (1, ck) broadcast

        # exact GELU (matches torch.nn.GELU() default)
        act = 0.5 * conv * (1.0 + lax.erf(conv * inv_sqrt2))

        # fc2 partial matmul for this hidden-channel tile, fp32 accumulation.
        act2d = act.reshape(th * W, ck).astype(compute_dtype)
        acc_ref[...] += jnp.dot(act2d, w2_ref[...],
                                preferred_element_type=jnp.float32)

        @pl.when(k == pl.num_programs(3) - 1)
        def _():
            o_ref[0] = (acc_ref[...] + b2_ref[...]).astype(o_ref.dtype)

    return kernel


def fused_dwconv_gelu_linear_pallas(h, dw_w, dw_b, w2, b2, *, out_dtype=None,
                                    compute_dtype=None, row_tile=None,
                                    tn=256, ck=512):
    """h: (B, H, W, C) fc1 output; dw_w: (3, 3, C); dw_b: (C,); w2: (C, N); b2: (N,).
    Returns (B, H*W, N)."""
    B, H, W, C = h.shape
    C2, Nout = w2.shape
    assert C == C2
    out_dtype = out_dtype if out_dtype is not None else h.dtype
    compute_dtype = compute_dtype if compute_dtype is not None else h.dtype
    if w2.dtype != compute_dtype:
        w2 = w2.astype(compute_dtype)

    ck = _pick_tile(C, ck, 128)
    tn = _pick_tile(Nout, tn, 128)
    th = row_tile if row_tile is not None else _pick_row_tile(H, W, ck)
    assert H % th == 0 and ((th * W) % 8 == 0 or th == H), "bad conv row tile"
    nh, nj, nk = H // th, Nout // tn, C // ck

    dwb2 = dw_b.reshape(1, C)
    b22 = b2.reshape(1, Nout).astype(jnp.float32)

    main_spec = pl.BlockSpec((1, th, W, ck), lambda bi, hi, j, k: (bi, hi, 0, k))
    # Halo rows: H block size 1 => block index along H is the row index itself.
    top_spec = pl.BlockSpec(
        (1, 1, W, ck), lambda bi, hi, j, k: (bi, jnp.maximum(hi * th - 1, 0), 0, k))
    bot_spec = pl.BlockSpec(
        (1, 1, W, ck), lambda bi, hi, j, k: (bi, jnp.minimum(hi * th + th, H - 1), 0, k))

    return pl.pallas_call(
        _make_fused_kernel(th, W, compute_dtype),
        out_shape=jax.ShapeDtypeStruct((B, H * W, Nout), out_dtype),
        grid_spec=pltpu.PrefetchScalarGridSpec(
            num_scalar_prefetch=0,
            grid=(B, nh, nj, nk),
            in_specs=[
                main_spec,
                top_spec,
                bot_spec,
                pl.BlockSpec((3, 3, ck), lambda bi, hi, j, k: (0, 0, k)),
                pl.BlockSpec((1, ck), lambda bi, hi, j, k: (0, k)),
                pl.BlockSpec((ck, tn), lambda bi, hi, j, k: (k, j)),
                pl.BlockSpec((1, tn), lambda bi, hi, j, k: (0, j)),
            ],
            out_specs=pl.BlockSpec((1, th * W, tn),
                                   lambda bi, hi, j, k: (bi, hi, j)),
            scratch_shapes=[pltpu.VMEM((th * W, tn), jnp.float32)],
        ),
        compiler_params=pltpu.CompilerParams(
            dimension_semantics=("parallel", "parallel", "parallel", "arbitrary"),
            vmem_limit_bytes=48 * 1024 * 1024,
        ),
    )(h, h, h, dw_w, dwb2, w2, b22)


# -----------------------------------------------------------------------------
# Mlp forward (drop=0.0 -> dropout is identity)
# -----------------------------------------------------------------------------
def mlp_forward(x, H, W, params, *, mxu_dtype=None, conv_row_tile=None):
    # x: (B, N, C_in) with N == H*W
    B, N, C_in = x.shape
    assert N == H * W
    hidden = params["w1"].shape[1]

    compute = mxu_dtype if mxu_dtype is not None else x.dtype
    hidden_dtype = compute                   # hidden tensor is bf16 end-to-end on bf16 path

    # Weight casts happen once per forward (store params in bf16 in a real model).
    w1 = params["w1"].astype(compute)
    w2 = params["w2"].astype(compute)

    # fc1: hidden written straight from the kernel in `hidden_dtype`.
    h = linear_pallas(x.reshape(B * N, C_in), w1, params["b1"],
                      out_dtype=hidden_dtype, compute_dtype=compute)
    h = h.reshape(B, H, W, hidden)           # pure row-major metadata reshape

    # dwconv + GELU + fc2 fused: post-GELU hidden never touches HBM.
    y = fused_dwconv_gelu_linear_pallas(
        h, params["dw_w"], params["dw_b"], w2, params["b2"],
        out_dtype=x.dtype, compute_dtype=compute, row_tile=conv_row_tile)
    return y                                  # (B, N, out_features)


# -----------------------------------------------------------------------------
# Pure-JAX reference (high precision, for the sanity check)
# -----------------------------------------------------------------------------
def mlp_reference(x, H, W, params):
    B, N, C_in = x.shape
    hidden = params["w1"].shape[1]
    hp = lax.Precision.HIGHEST
    h = jnp.dot(x.reshape(B * N, C_in), params["w1"], precision=hp) + params["b1"]
    h = h.reshape(B, H, W, hidden)
    w_hwio = params["dw_w"].reshape(3, 3, 1, hidden)
    h = lax.conv_general_dilated(
        h, w_hwio, window_strides=(1, 1), padding="SAME",
        dimension_numbers=("NHWC", "HWIO", "NHWC"),
        feature_group_count=hidden, precision=hp) + params["dw_b"]
    h = 0.5 * h * (1.0 + lax.erf(h / math.sqrt(2.0)))
    h = h.reshape(B * N, hidden)
    y = jnp.dot(h, params["w2"], precision=hp) + params["b2"]
    return y.reshape(B, N, params["w2"].shape[1])


# -----------------------------------------------------------------------------
def init_params(key, in_features, hidden_features, out_features):
    ks = jax.random.split(key, 6)

    def uni(k, shape, fan_in):
        bound = 1.0 / math.sqrt(fan_in)
        return jax.random.uniform(k, shape, jnp.float32, -bound, bound)

    return {
        "w1":   uni(ks[0], (in_features, hidden_features), in_features),
        "b1":   uni(ks[1], (hidden_features,), in_features),
        # depthwise conv weight stored as (kh, kw, C)  (== torch (C,1,kh,kw) transposed)
        "dw_w": uni(ks[2], (3, 3, hidden_features), 9),
        "dw_b": uni(ks[3], (hidden_features,), 9),
        "w2":   uni(ks[4], (hidden_features, out_features), hidden_features),
        "b2":   uni(ks[5], (out_features,), hidden_features),
    }


if __name__ == "__main__":
    key = jax.random.PRNGKey(0)
    B, H, W = 2, 16, 16
    N = H * W
    in_features, hidden_features, out_features = 128, 256, 128   # lane-dense (x128)

    kx, kp = jax.random.split(key)
    x = jax.random.normal(kx, (B, N, in_features), jnp.float32)
    params = init_params(kp, in_features, hidden_features, out_features)

    ref = mlp_reference(x, H, W, params)

    # fp32 path; conv_row_tile=8 -> 2 row tiles per image, exercises the halo logic.
    out_f32 = jax.block_until_ready(mlp_forward(x, H, W, params, conv_row_tile=8))
    np.testing.assert_allclose(np.asarray(out_f32), np.asarray(ref),
                               rtol=1e-4, atol=1e-4)

    # bf16 hidden / bf16 MXU-operand path (fp32 accumulation) -- v6e/v7x recipe.
    out_bf16 = jax.block_until_ready(
        mlp_forward(x, H, W, params, mxu_dtype=jnp.bfloat16))
    np.testing.assert_allclose(np.asarray(out_bf16), np.asarray(ref),
                               rtol=5e-2, atol=5e-2)

    print("KERNEL_OK")
</pallas_src>

<mosaic_0001>
module attributes {stable_mosaic.version = 11 : i64} {
  func.func @kernel(%arg0: i32, %arg1: i32, %arg2: memref<256x128xf32, #tpu.memory_space<vmem>>, %arg3: memref<128x256xf32, #tpu.memory_space<vmem>>, %arg4: memref<1x256xf32, #tpu.memory_space<vmem>>, %arg5: memref<256x256xf32, #tpu.memory_space<vmem>>) attributes {dimension_semantics = [#tpu.dimension_semantics<parallel>, #tpu.dimension_semantics<parallel>], iteration_bounds = array<i64: 2, 1>, scalar_prefetch = 0 : i64, scratch_operands = 0 : i64, tpu.core_type = #tpu.core_type<tc>, window_params = [{transform_indices = @transform_0, window_bounds = array<i64: 256, 128>}, {transform_indices = @transform_1, window_bounds = array<i64: 128, 256>}, {transform_indices = @transform_2, window_bounds = array<i64: 1, 256>}, {transform_indices = @transform_3, window_bounds = array<i64: 256, 256>}]} {
    %c0 = arith.constant 0 : index
    %c0_0 = arith.constant 0 : index
    %0 = vector.load %arg2[%c0, %c0_0] : memref<256x128xf32, #tpu.memory_space<vmem>>, vector<256x128xf32>
    %c0_1 = arith.constant 0 : index
    %c0_2 = arith.constant 0 : index
    %1 = vector.load %arg3[%c0_1, %c0_2] : memref<128x256xf32, #tpu.memory_space<vmem>>, vector<128x256xf32>
    %cst = arith.constant dense<0.000000e+00> : vector<256x256xf32>
    %2 = tpu.matmul %0, %1, %cst {dimension_numbers = #tpu.dot_dimension_numbers<[1], [0], [0], [1], [0, 0, 1, 1], [], []>} : vector<256x128xf32>, vector<128x256xf32>, vector<256x256xf32> -> vector<256x256xf32>
    %c0_3 = arith.constant 0 : index
    %c0_4 = arith.constant 0 : index
    %3 = vector.load %arg4[%c0_3, %c0_4] : memref<1x256xf32, #tpu.memory_space<vmem>>, vector<1x256xf32>
    %4 = vector.broadcast %3 : vector<1x256xf32> to vector<256x256xf32>
    %5 = arith.addf %2, %4 : vector<256x256xf32>
    %c0_5 = arith.constant 0 : index
    %c0_6 = arith.constant 0 : index
    %6 = vector.load %arg5[%c0_5, %c0_6] : memref<256x256xf32, #tpu.memory_space<vmem>>, vector<256x256xf32>
    tpu.vector_store %arg5[%c0_5, %c0_6], %5 {strides = array<i32>} : memref<256x256xf32, #tpu.memory_space<vmem>>, vector<256x256xf32>,
    return
  }
  func.func @transform_0(%arg0: i32, %arg1: i32) -> (i32, i32) {
    %c0_i32 = arith.constant 0 : i32
    %c0_i32_0 = arith.constant 0 : i32
    return %arg0, %c0_i32 : i32, i32
  }
  func.func @transform_1(%arg0: i32, %arg1: i32) -> (i32, i32) {
    %c0_i32 = arith.constant 0 : i32
    %c0_i32_0 = arith.constant 0 : i32
    return %c0_i32, %arg1 : i32, i32
  }
  func.func @transform_2(%arg0: i32, %arg1: i32) -> (i32, i32) {
    %c0_i32 = arith.constant 0 : i32
    %c0_i32_0 = arith.constant 0 : i32
    return %c0_i32, %arg1 : i32, i32
  }
  func.func @transform_3(%arg0: i32, %arg1: i32) -> (i32, i32) {
    %c0_i32 = arith.constant 0 : i32
    return %arg0, %arg1 : i32, i32
  }
}

</mosaic_0001>

<llo_original>
// kernel: tpu_custom_call.1
$region0: #{tpu_custom_call.1}
  #allocation0 [shape = 'u32[]', space=smem, size = 0x4, offset = 0x4, fixed_abs, tag = 'smem constant byte address 0x4 - core index']
  #allocation1 [shape = 'u32[144,128]{1,0:T(1,128)}', space=vmem, size = 0x12000, scoped, tag = 'internal scratch']
  %s0 = inlined_call_operand.hbm [shape: f32[512,128], index: 0, kind: input, shape index: {}]
  %s1 = inlined_call_operand.hbm [shape: f32[128,256], index: 1, kind: input, shape index: {}]
  %s2 = inlined_call_operand.vmem [shape: f32[1,256], index: 2, kind: input, shape index: {}]
  %s3 = inlined_call_operand.hbm [shape: f32[512,256], index: 3, kind: output, shape index: {}]
  %s4 = sld [smem:[#allocation0]]
  $region53: #{tpu_custom_call.1} parent=0
    _
  %s6 = ssub.s32 1, %s4
  %s7 = scalar_select 0, %s6, %s4
  $region1: #{tpu_custom_call.1} parent=0
    #allocation2 [shape = 'u8[262144]{0}', space=vmem, size = 0x40000, scoped, tag = 'input window, operand 0']
    #allocation3 [shape = 's32[2]{0}', space=sflag, size = 0x8, scoped, tag = 'scoped memory for tpu_custom_call.1']
    #allocation4 [shape = 's32[2]{0}', space=sflag, size = 0x8, scoped, tag = 'scoped memory for tpu_custom_call.1']
    #allocation5 [shape = 'u8[131072]{0}', space=vmem, size = 0x20000, scoped, tag = 'input window, operand 1, single buffered']
    #allocation6 [shape = 's32[1]{0}', space=sflag, size = 0x4, scoped, tag = 'scoped memory for tpu_custom_call.1']
    #allocation7 [shape = 'u8[524288]{0}', space=vmem, size = 0x80000, scoped, tag = 'output window, operand 0']
    %8 = vsyncpa [#allocation3], 0
    %s9 = scalar_lea.sflag [#allocation3], 1
    %10 = vsyncpa %s9, 0
    %11 = vsyncpa [#allocation6], 0
    %12 = vsyncpa [#allocation4], 0
    %s13 = scalar_lea.sflag [#allocation4], 1
    %14 = vsyncpa %s13, 0
    loop: start=0, step=1, limit=4
    $region2: #{tpu_custom_call.1} parent=1 // loop_pre_header
      _
    $region3: #{tpu_custom_call.1} parent=1 // loop_header
      %s16 = sphi 0, %s20
      %p17 = scmp.ge.s32.totalorder %s16, 4
      %s23 = sphi 0, %s35
      %s24 = sphi 0, %s31
      %s25 = sphi 0, %s23
      %s26 = sphi 0, %s24
      %s27 = sphi 0, %s25
      %s28 = sphi 0, %s26
      %s38 = sphi 0, %s40
      %s41 = sphi 0, %s38
      %s42 = sphi 0, %s41
      %s58 = sphi 0, %s42
      %s64 = sphi 0, %s66
      %s67 = sphi 0, %s64
      %s68 = sphi 0, %s67
      %s84 = sphi 0, %s68
      %s90 = sphi 0, %s92
      %s93 = sphi 0, %s90
      %s94 = sphi 0, %s93
      %s110 = sphi 0, %s94
      %s118 = sphi 0, %s120
      %s121 = sphi 0, %s118
      %s122 = sphi 0, %s121
      %s138 = sphi 0, %s122
    $region4: #{tpu_custom_call.1} parent=1 // loop_header_branch
      %19 = sbr.rel (%p17) target = $region8
    $region5: #{tpu_custom_call.1} parent=1 // loop_body
      %s21 = ssub.s32 %s16, 1
      %s22 = ssub.s32 %s16, 2
      %s29 = sadd.s32 1, %s24
      %p30 = scmp.ge.s32.totalorder %s29, 1
      %s31 = scalar_select %p30, 0, %s29
      %s32 = sadd.s32 1, %s23
      %s33 = scalar_select %p30, %s32, %s23
      %p34 = scmp.ge.s32.totalorder %s33, 2
      %s35 = scalar_select %p34, 0, %s33
      %s36 = ssub.s32 %s23, %s35
      %p37 = scmp.eq.s32.totalorder %s36, 0
      %s39 = sadd.s32 %s38, 1
      %s40 = scalar_select %p37, %s38, %s39
      %p43 = pneg %p37
      %p44 = scmp.eq.s32.totalorder %s16, 1
      %p45 = por %p43, %p44
      %p46 = scmp.ne.s32.totalorder %s38, %s41
      %p47 = scmp.eq.s32.totalorder %s16, 0
      %p48 = por %p46, %p47
      %p49 = scmp.ne.s32.totalorder %s38, %s41
      %p50 = scmp.eq.s32.totalorder %s21, 1
      %p51 = por %p49, %p50
      %p52 = scmp.ne.s32.totalorder %s41, %s42
      %p53 = scmp.eq.s32.totalorder %s21, 0
      %p54 = por %p52, %p53
      %p55 = scmp.ne.s32.totalorder %s41, %s42
      %p56 = scmp.eq.s32.totalorder %s22, 1
      %p57 = por %p55, %p56
      %p59 = scmp.ne.s32.totalorder %s42, %s58
      %p60 = scmp.eq.s32.totalorder %s22, 0
      %p61 = por %p59, %p60
      %s62 = ssub.s32 %s24, %s31
      %p63 = scmp.eq.s32.totalorder %s62, 0
      %s65 = sadd.s32 %s64, 1
      %s66 = scalar_select %p63, %s64, %s65
      %p69 = pneg %p63
      %p70 = scmp.eq.s32.totalorder %s16, 1
      %p71 = por %p69, %p70
      %p72 = scmp.ne.s32.totalorder %s64, %s67
      %p73 = scmp.eq.s32.totalorder %s16, 0
      %p74 = por %p72, %p73
      %p75 = scmp.ne.s32.totalorder %s64, %s67
      %p76 = scmp.eq.s32.totalorder %s21, 1
      %p77 = por %p75, %p76
      %p78 = scmp.ne.s32.totalorder %s67, %s68
      %p79 = scmp.eq.s32.totalorder %s21, 0
      %p80 = por %p78, %p79
      %p81 = scmp.ne.s32.totalorder %s67, %s68
      %p82 = scmp.eq.s32.totalorder %s22, 1
      %p83 = por %p81, %p82
      %p85 = scmp.ne.s32.totalorder %s68, %s84
      %p86 = scmp.eq.s32.totalorder %s22, 0
      %p87 = por %p85, %p86
      %s88 = ssub.s32 %s24, %s31
      %p89 = scmp.eq.s32.totalorder %s88, 0
      %s91 = sadd.s32 %s90, 1
      %s92 = scalar_select %p89, %s90, %s91
      %p95 = pneg %p89
      %p96 = scmp.eq.s32.totalorder %s16, 1
      %p97 = por %p95, %p96
      %p98 = scmp.ne.s32.totalorder %s90, %s93
      %p99 = scmp.eq.s32.totalorder %s16, 0
      %p100 = por %p98, %p99
      %p101 = scmp.ne.s32.totalorder %s90, %s93
      %p102 = scmp.eq.s32.totalorder %s21, 1
      %p103 = por %p101, %p102
      %p104 = scmp.ne.s32.totalorder %s93, %s94
      %p105 = scmp.eq.s32.totalorder %s21, 0
      %p106 = por %p104, %p105
      %p107 = scmp.ne.s32.totalorder %s93, %s94
      %p108 = scmp.eq.s32.totalorder %s22, 1
      %p109 = por %p107, %p108
      %p111 = scmp.ne.s32.totalorder %s94, %s110
      %p112 = scmp.eq.s32.totalorder %s22, 0
      %p113 = por %p111, %p112
      %s114 = ssub.s32 %s23, %s35
      %s115 = ssub.s32 %s24, %s31
      %s116 = sor.u32 %s114, %s115
      %p117 = scmp.eq.s32.totalorder %s116, 0
      %s119 = sadd.s32 %s118, 1
      %s120 = scalar_select %p117, %s118, %s119
      %p123 = pneg %p117
      %p124 = scmp.eq.s32.totalorder %s16, 1
      %p125 = por %p123, %p124
      %p126 = scmp.ne.s32.totalorder %s118, %s121
      %p127 = scmp.eq.s32.totalorder %s16, 0
      %p128 = por %p126, %p127
      %p129 = scmp.ne.s32.totalorder %s118, %s121
      %p130 = scmp.eq.s32.totalorder %s21, 1
      %p131 = por %p129, %p130
      %p132 = scmp.ne.s32.totalorder %s121, %s122
      %p133 = scmp.eq.s32.totalorder %s21, 0
      %p134 = por %p132, %p133
      %p135 = scmp.ne.s32.totalorder %s121, %s122
      %p136 = scmp.eq.s32.totalorder %s22, 1
      %p137 = por %p135, %p136
      %p139 = scmp.ne.s32.totalorder %s122, %s138
      %p140 = scmp.eq.s32.totalorder %s22, 0
      %p141 = por %p139, %p140
      %p142 = scmp.le.s32.totalorder 1, %s16
      %p143 = scmp.lt.s32.totalorder %s16, 3
      %p144 = pnand %p142, %p143
      %p145 = pneg %p144
      // Predicated region
      $region9: #{tpu_custom_call.1} parent=5 // pred_check
        _
      $region10: #{tpu_custom_call.1} parent=5 // pred_check_branch
        %147 = sbr.rel (%p144) target = $region12
      $region11: #{tpu_custom_call.1} parent=5 // pred_region
        %s148 = ssub.s32 %s16, 1
        // Predicated region
        $region13: #{tpu_custom_call.1} parent=11 // pred_check
          %p149 = pneg %p80
        $region14: #{tpu_custom_call.1} parent=11 // pred_check_branch
          %151 = sbr.rel (%p149) target = $region16
        $region15: #{tpu_custom_call.1} parent=11 // pred_region
          %s152 = smul.u32 2, %s26
          %s154 = ssub.s32 4096, 4096
          %155 = vsyncadd [#allocation6], %s154
          %s156 = smul.addr %s152, 128
          %s157 = scalar_lea.hbm %s1, %s156
          %s158 = sshll.u32 [#allocation5], 4
          %s159 = int_to_ptr.vmem [resolvable:$true] %s158
          %164 = dma.hbm_to_vmem [thread:$0]  %s157, 4096, %s159, [#allocation6], 256, 256, 16
        $region16: #{tpu_custom_call.1} parent=11 // pred_fallthru
          _
        // Predicated region
        $region17: #{tpu_custom_call.1} parent=11 // pred_check
          %p165 = pneg %p106
        $region18: #{tpu_custom_call.1} parent=11 // pred_check_branch
          %167 = sbr.rel (%p165) target = $region20
        $region19: #{tpu_custom_call.1} parent=11 // pred_region
          %s168 = smul.u32 2, %s26
          %p169 = scmp.lt.s32.totalorder %s168, 1
          %s170 = scalar_select %p169, %s168, 1
          %s171 = scalar_lea.vmem %s2, %s170
          %s172 = smul.u32 2, %s26
        $region20: #{tpu_custom_call.1} parent=11 // pred_fallthru
          _
      $region12: #{tpu_custom_call.1} parent=5 // pred_fallthru
        _
      %p173 = scmp.lt.s32.totalorder %s16, 2
      // Predicated region
      $region21: #{tpu_custom_call.1} parent=5 // pred_check
        %p174 = pneg %p173
      $region22: #{tpu_custom_call.1} parent=5 // pred_check_branch
        %176 = sbr.rel (%p174) target = $region24
      $region23: #{tpu_custom_call.1} parent=5 // pred_region
        // Predicated region
        $region25: #{tpu_custom_call.1} parent=23 // pred_check
          %p177 = pneg %p48
        $region26: #{tpu_custom_call.1} parent=23 // pred_check_branch
          %179 = sbr.rel (%p177) target = $region28
        $region27: #{tpu_custom_call.1} parent=23 // pred_region
          %s180 = sand.u32 %s38, 1
          %s181 = scalar_lea.sflag [#allocation3], %s180
          %s182 = sand.u32 %s38, 1
          %s183 = smul.addr %s182, 256
          %s184 = scalar_lea.vmem [#allocation2], %s183
          %s185 = smul.u32 32, %s23
          %s187 = ssub.s32 4096, 4096
          %188 = vsyncadd %s181, %s187
          %s189 = smul.addr %s185, 128
          %s190 = scalar_lea.hbm %s0, %s189
          %s191 = sshll.u32 %s184, 4
          %s192 = int_to_ptr.vmem [resolvable:$true] %s191
          %197 = dma.hbm_to_vmem [thread:$0]  %s190, 4096, %s192, %s181, 128, 128, 8
        $region28: #{tpu_custom_call.1} parent=23 // pred_fallthru
          _
      $region24: #{tpu_custom_call.1} parent=5 // pred_fallthru
        _
      %p198 = scmp.le.s32.totalorder 1, %s16
      %p199 = scmp.lt.s32.totalorder %s16, 3
      %p200 = pnand %p198, %p199
      %p201 = pneg %p200
      // Predicated region
      $region29: #{tpu_custom_call.1} parent=5 // pred_check
        _
      $region30: #{tpu_custom_call.1} parent=5 // pred_check_branch
        %203 = sbr.rel (%p200) target = $region32
      $region31: #{tpu_custom_call.1} parent=5 // pred_region
        %s204 = ssub.s32 %s16, 1
        %s205 = sand.u32 %s41, 1
        %s206 = scalar_lea.sflag [#allocation3], %s205
        %s207 = sand.u32 %s41, 1
        %s208 = smul.addr %s207, 256
        %s209 = scalar_lea.vmem [#allocation2], %s208
        // Predicated region
        $region33: #{tpu_custom_call.1} parent=31 // pred_check
          %p210 = pneg %p54
        $region34: #{tpu_custom_call.1} parent=31 // pred_check_branch
          %212 = sbr.rel (%p210) target = $region36
        $region35: #{tpu_custom_call.1} parent=31 // pred_region
          %213 = dma.done %s206, 4096
        $region36: #{tpu_custom_call.1} parent=31 // pred_fallthru
          _
        // Predicated region
        $region37: #{tpu_custom_call.1} parent=31 // pred_check
          %p214 = pneg %p80
        $region38: #{tpu_custom_call.1} parent=31 // pred_check_branch
          %216 = sbr.rel (%p214) target = $region40
        $region39: #{tpu_custom_call.1} parent=31 // pred_region
          %217 = dma.done [#allocation6], 4096
        $region40: #{tpu_custom_call.1} parent=31 // pred_fallthru
          _
        %s218 = sand.u32 %s41, 1
        %s219 = scalar_lea.sflag [#allocation3], %s218
        %s220 = sand.u32 %s41, 1
        %s221 = smul.addr %s220, 256
        %s222 = scalar_lea.vmem [#allocation2], %s221
        %p223 = pneg %p54
        %p224 = pneg %p51
        %p225 = pneg %p80
        %p226 = pneg %p77
        %s227 = smul.u32 2, %s26
        %p228 = scmp.lt.s32.totalorder %s227, 1
        %s229 = scalar_select %p228, %s227, 1
        %s230 = scalar_lea.vmem %s2, %s229
        %p231 = pneg %p106
        %p232 = pneg %p103
        %p233 = pneg %p134
        %p234 = pneg %p131
        %s235 = sand.u32 %s121, 1
        %s236 = scalar_lea.sflag [#allocation4], %s235
        %s237 = sand.u32 %s121, 1
        %s238 = smul.addr %s237, 512
        %s239 = scalar_lea.vmem [#allocation7], %s238
        %s240 = smul.u32 32, %s25
        %s241 = smul.u32 2, %s26
        %s242 = smul.u32 2, %s26
        %p243 = scmp.lt.s32.totalorder %s242, 1
        %s244 = scalar_select %p243, %s242, 1
        %s245 = scalar_lea.vmem %s2, %s244
        %s246 = smul.u32 2, %s26
        %s247 = smul.u32 32, %s25
        %s248 = smul.u32 2, %s26
        %v249 = vld [vmem:[%s209] sm:$0xff]
        %v250 = vld [vmem:[%s209 + $0x8] sm:$0xff]
        %v251 = vld [vmem:[%s209 + $0x10] sm:$0xff]
        %v252 = vld [vmem:[%s209 + $0x18] sm:$0xff]
        %v253 = vld [vmem:[%s209 + $0x20] sm:$0xff]
        %v254 = vld [vmem:[%s209 + $0x28] sm:$0xff]
        %v255 = vld [vmem:[%s209 + $0x30] sm:$0xff]
        %v256 = vld [vmem:[%s209 + $0x38] sm:$0xff]
        %v257 = vld [vmem:[%s209 + $0x40] sm:$0xff]
        %v258 = vld [vmem:[%s209 + $0x48] sm:$0xff]
        %v259 = vld [vmem:[%s209 + $0x50] sm:$0xff]
        %v260 = vld [vmem:[%s209 + $0x58] sm:$0xff]
        %v261 = vld [vmem:[%s209 + $0x60] sm:$0xff]
        %v262 = vld [vmem:[%s209 + $0x68] sm:$0xff]
        %v263 = vld [vmem:[%s209 + $0x70] sm:$0xff]
        %v264 = vld [vmem:[%s209 + $0x78] sm:$0xff]
        %v265 = vld [vmem:[%s209 + $0x80] sm:$0xff]
        %v266 = vld [vmem:[%s209 + $0x88] sm:$0xff]
        %v267 = vld [vmem:[%s209 + $0x90] sm:$0xff]
        %v268 = vld [vmem:[%s209 + $0x98] sm:$0xff]
        %v269 = vld [vmem:[%s209 + $0xa0] sm:$0xff]
        %v270 = vld [vmem:[%s209 + $0xa8] sm:$0xff]
        %v271 = vld [vmem:[%s209 + $0xb0] sm:$0xff]
        %v272 = vld [vmem:[%s209 + $0xb8] sm:$0xff]
        %v273 = vld [vmem:[%s209 + $0xc0] sm:$0xff]
        %v274 = vld [vmem:[%s209 + $0xc8] sm:$0xff]
        %v275 = vld [vmem:[%s209 + $0xd0] sm:$0xff]
        %v276 = vld [vmem:[%s209 + $0xd8] sm:$0xff]
        %v277 = vld [vmem:[%s209 + $0xe0] sm:$0xff]
        %v278 = vld [vmem:[%s209 + $0xe8] sm:$0xff]
        %v279 = vld [vmem:[%s209 + $0xf0] sm:$0xff]
        %v280 = vld [vmem:[%s209 + $0xf8] sm:$0xff]
        %v281 = vld [vmem:[#allocation5] sm:$0xff]
        %v282 = vld [vmem:[#allocation5 + $0x8] sm:$0xff]
        %v283 = vld [vmem:[#allocation5 + $0x10] sm:$0xff]
        %v284 = vld [vmem:[#allocation5 + $0x18] sm:$0xff]
        %v285 = vld [vmem:[#allocation5 + $0x20] sm:$0xff]
        %v286 = vld [vmem:[#allocation5 + $0x28] sm:$0xff]
        %v287 = vld [vmem:[#allocation5 + $0x30] sm:$0xff]
        %v288 = vld [vmem:[#allocation5 + $0x38] sm:$0xff]
        %v289 = vld [vmem:[#allocation5 + $0x40] sm:$0xff]
        %v290 = vld [vmem:[#allocation5 + $0x48] sm:$0xff]
        %v291 = vld [vmem:[#allocation5 + $0x50] sm:$0xff]
        %v292 = vld [vmem:[#allocation5 + $0x58] sm:$0xff]
        %v293 = vld [vmem:[#allocation5 + $0x60] sm:$0xff]
        %v294 = vld [vmem:[#allocation5 + $0x68] sm:$0xff]
        %v295 = vld [vmem:[#allocation5 + $0x70] sm:$0xff]
        %v296 = vld [vmem:[#allocation5 + $0x78] sm:$0xff]
        %v297 = vld [vmem:[#allocation5 + $0x80] sm:$0xff]
        %v298 = vld [vmem:[#allocation5 + $0x88] sm:$0xff]
        %v299 = vld [vmem:[#allocation5 + $0x90] sm:$0xff]
        %v300 = vld [vmem:[#allocation5 + $0x98] sm:$0xff]
        %v301 = vld [vmem:[#allocation5 + $0xa0] sm:$0xff]
        %v302 = vld [vmem:[#allocation5 + $0xa8] sm:$0xff]
        %v303 = vld [vmem:[#allocation5 + $0xb0] sm:$0xff]
        %v304 = vld [vmem:[#allocation5 + $0xb8] sm:$0xff]
        %v305 = vld [vmem:[#allocation5 + $0xc0] sm:$0xff]
        %v306 = vld [vmem:[#allocation5 + $0xc8] sm:$0xff]
        %v307 = vld [vmem:[#allocation5 + $0xd0] sm:$0xff]
        %v308 = vld [vmem:[#allocation5 + $0xd8] sm:$0xff]
        %v309 = vld [vmem:[#allocation5 + $0xe0] sm:$0xff]
        %v310 = vld [vmem:[#allocation5 + $0xe8] sm:$0xff]
        %v311 = vld [vmem:[#allocation5 + $0xf0] sm:$0xff]
        %v312 = vld [vmem:[#allocation5 + $0xf8] sm:$0xff]
        %v313 = vld [vmem:[%s245] sm:$0x3]
        %v315 = vlaneseq
        %v316 = vshrl.u32 %v315, 7
        %v317 = vsub.s32 0, %v316
        %v318 = vrot.slane %v313, %v317
        %v319 = vlaneseq
        %v320 = vshrl.u32 %v319, 7
        %v321 = vsub.s32 1, %v320
        %v322 = vrot.slane %v313, %v321
        %325 = vmatprep.subr.mxu0 %v282
        %326 = vmatpush1.msra.mxu0 %v281
        %327 = vmatprep.subr.mxu0 %v284
        %328 = vmatpush1.msra.mxu0 %v283
        %329 = vmatprep.subr.mxu0 %v286
        %330 = vmatpush1.msra.mxu0 %v285
        %331 = vmatprep.subr.mxu0 %v288
        %332 = vmatpush1.msra.mxu0 %v287
        %333 = vmatprep.subr.mxu0 %v290
        %334 = vmatpush1.msra.mxu0 %v289
        %335 = vmatprep.subr.mxu0 %v292
        %336 = vmatpush1.msra.mxu0 %v291
        %337 = vmatprep.subr.mxu0 %v294
        %338 = vmatpush1.msra.mxu0 %v293
        %339 = vmatprep.subr.mxu0 %v296
        %340 = vmatpush1.msra.mxu0 %v295
        %341 = vmatprep.subr.mxu0 %v298
        %342 = vmatpush1.msra.mxu0 %v297
        %343 = vmatprep.subr.mxu0 %v300
        %344 = vmatpush1.msra.mxu0 %v299
        %345 = vmatprep.subr.mxu0 %v302
        %346 = vmatpush1.msra.mxu0 %v301
        %347 = vmatprep.subr.mxu0 %v304
        %348 = vmatpush1.msra.mxu0 %v303
        %349 = vmatprep.subr.mxu0 %v306
        %350 = vmatpush1.msra.mxu0 %v305
        %351 = vmatprep.subr.mxu0 %v308
        %352 = vmatpush1.msra.mxu0 %v307
        %353 = vmatprep.subr.mxu0 %v310
        %354 = vmatpush1.msra.mxu0 %v309
        %355 = vmatprep.subr.mxu0 %v312
        %356 = vmatpush1.msra.mxu0 %v311
        %357 = vmatprep.subr.mxu0 0.0
        %358 = vmatpush1.msra.mxu0 0.0
        %359 = vmatprep.subr.mxu0 0.0
        %360 = vmatpush1.msra.mxu0 0.0
        %361 = vmatprep.subr.mxu0 0.0
        %362 = vmatpush1.msra.mxu0 0.0
        %363 = vmatprep.subr.mxu0 0.0
        %364 = vmatpush1.msra.mxu0 0.0
        %365 = vmatprep.subr.mxu0 0.0
        %366 = vmatpush1.msra.mxu0 0.0
        %367 = vmatprep.subr.mxu0 0.0
        %368 = vmatpush1.msra.mxu0 0.0
        %369 = vmatprep.subr.mxu0 0.0
        %370 = vmatpush1.msra.mxu0 0.0
        %371 = vmatprep.subr.mxu0 0.0
        %372 = vmatpush1.msra.mxu0 0.0
        %373 = vmatprep.subr.mxu0 0.0
        %374 = vmatpush1.msra.mxu0 0.0
        %375 = vmatprep.subr.mxu0 0.0
        %376 = vmatpush1.msra.mxu0 0.0
        %377 = vmatprep.subr.mxu0 0.0
        %378 = vmatpush1.msra.mxu0 0.0
        %379 = vmatprep.subr.mxu0 0.0
        %380 = vmatpush1.msra.mxu0 0.0
        %381 = vmatprep.subr.mxu0 0.0
        %382 = vmatpush1.msra.mxu0 0.0
        %383 = vmatprep.subr.mxu0 0.0
        %384 = vmatpush1.msra.mxu0 0.0
        %385 = vmatprep.subr.mxu0 0.0
        %386 = vmatpush1.msra.mxu0 0.0
        %387 = vmatprep.subr.mxu0 0.0
        %388 = vmatpush1.msra.mxu0 0.0
        %389 = vmatprep.mubr.f32.mxu0 0.0
        %390 = vmatmul.mubr.f32.gmra.mrb[0].mxu0 %v249
        %v391 = vpop.f32.mrb[0].mxu0
        %v392 = vadd.f32 %v318, %v391
        %v393 = vpop.f32.mrb[0].mxu0
        %v394 = vadd.f32 %v322, %v393
        %395 = vmatprep.mubr.f32.mxu0 0.0
        %396 = vmatmul.mubr.f32.gmra.mrb[0].mxu0 %v250
        %v397 = vpop.f32.mrb[0].mxu0
        %v398 = vadd.f32 %v318, %v397
        %v399 = vpop.f32.mrb[0].mxu0
        %v400 = vadd.f32 %v322, %v399
        %401 = vmatprep.mubr.f32.mxu0 0.0
        %402 = vmatmul.mubr.f32.gmra.mrb[0].mxu0 %v251
        %v403 = vpop.f32.mrb[0].mxu0
        %v404 = vadd.f32 %v318, %v403
        %v405 = vpop.f32.mrb[0].mxu0
        %v406 = vadd.f32 %v322, %v405
        %407 = vmatprep.mubr.f32.mxu0 0.0
        %408 = vmatmul.mubr.f32.gmra.mrb[0].mxu0 %v252
        %v409 = vpop.f32.mrb[0].mxu0
        %v410 = vadd.f32 %v318, %v409
        %v411 = vpop.f32.mrb[0].mxu0
        %v412 = vadd.f32 %v322, %v411
        %413 = vmatprep.mubr.f32.mxu0 0.0
        %414 = vmatmul.mubr.f32.gmra.mrb[0].mxu0 %v253
        %v415 = vpop.f32.mrb[0].mxu0
        %v416 = vadd.f32 %v318, %v415
        %v417 = vpop.f32.mrb[0].mxu0
        %v418 = vadd.f32 %v322, %v417
        %419 = vmatprep.mubr.f32.mxu0 0.0
        %420 = vmatmul.mubr.f32.gmra.mrb[0].mxu0 %v254
        %v421 = vpop.f32.mrb[0].mxu0
        %v422 = vadd.f32 %v318, %v421
        %v423 = vpop.f32.mrb[0].mxu0
        %v424 = vadd.f32 %v322, %v423
        %425 = vmatprep.mubr.f32.mxu0 0.0
        %426 = vmatmul.mubr.f32.gmra.mrb[0].mxu0 %v255
        %v427 = vpop.f32.mrb[0].mxu0
        %v428 = vadd.f32 %v318, %v427
        %v429 = vpop.f32.mrb[0].mxu0
        %v430 = vadd.f32 %v322, %v429
        %431 = vmatprep.mubr.f32.mxu0 0.0
        %432 = vmatmul.mubr.f32.gmra.mrb[0].mxu0 %v256
        %v433 = vpop.f32.mrb[0].mxu0
        %v434 = vadd.f32 %v318, %v433
        %v435 = vpop.f32.mrb[0].mxu0
        %v436 = vadd.f32 %v322, %v435
        %437 = vmatprep.mubr.f32.mxu0 0.0
        %438 = vmatmul.mubr.f32.gmra.mrb[0].mxu0 %v257
        %v439 = vpop.f32.mrb[0].mxu0
        %v440 = vadd.f32 %v318, %v439
        %v441 = vpop.f32.mrb[0].mxu0
        %v442 = vadd.f32 %v322, %v441
        %443 = vmatprep.mubr.f32.mxu0 0.0
        %444 = vmatmul.mubr.f32.gmra.mrb[0].mxu0 %v258
        %v445 = vpop.f32.mrb[0].mxu0
        %v446 = vadd.f32 %v318, %v445
        %v447 = vpop.f32.mrb[0].mxu0
        %v448 = vadd.f32 %v322, %v447
        %449 = vmatprep.mubr.f32.mxu0 0.0
        %450 = vmatmul.mubr.f32.gmra.mrb[0].mxu0 %v259
        %v451 = vpop.f32.mrb[0].mxu0
        %v452 = vadd.f32 %v318, %v451
        %v453 = vpop.f32.mrb[0].mxu0
        %v454 = vadd.f32 %v322, %v453
        %455 = vmatprep.mubr.f32.mxu0 0.0
        %456 = vmatmul.mubr.f32.gmra.mrb[0].mxu0 %v260
        %v457 = vpop.f32.mrb[0].mxu0
        %v458 = vadd.f32 %v318, %v457
        %v459 = vpop.f32.mrb[0].mxu0
        %v460 = vadd.f32 %v322, %v459
        %461 = vmatprep.mubr.f32.mxu0 0.0
        %462 = vmatmul.mubr.f32.gmra.mrb[0].mxu0 %v261
        %v463 = vpop.f32.mrb[0].mxu0
        %v464 = vadd.f32 %v318, %v463
        %v465 = vpop.f32.mrb[0].mxu0
        %v466 = vadd.f32 %v322, %v465
        %467 = vmatprep.mubr.f32.mxu0 0.0
        %468 = vmatmul.mubr.f32.gmra.mrb[0].mxu0 %v262
        %v469 = vpop.f32.mrb[0].mxu0
        %v470 = vadd.f32 %v318, %v469
        %v471 = vpop.f32.mrb[0].mxu0
        %v472 = vadd.f32 %v322, %v471
        %473 = vmatprep.mubr.f32.mxu0 0.0
        %474 = vmatmul.mubr.f32.gmra.mrb[0].mxu0 %v263
        %v475 = vpop.f32.mrb[0].mxu0
        %v476 = vadd.f32 %v318, %v475
        %v477 = vpop.f32.mrb[0].mxu0
        %v478 = vadd.f32 %v322, %v477
        %479 = vmatprep.mubr.f32.mxu0 0.0
        %480 = vmatmul.mubr.f32.gmra.mrb[0].mxu0 %v264
        %v481 = vpop.f32.mrb[0].mxu0
        %v482 = vadd.f32 %v318, %v481
        %v483 = vpop.f32.mrb[0].mxu0
        %v484 = vadd.f32 %v322, %v483
        %485 = vmatprep.mubr.f32.mxu0 0.0
        %486 = vmatmul.mubr.f32.gmra.mrb[0].mxu0 %v265
        %v487 = vpop.f32.mrb[0].mxu0
        %v488 = vadd.f32 %v318, %v487
        %v489 = vpop.f32.mrb[0].mxu0
        %v490 = vadd.f32 %v322, %v489
        %491 = vmatprep.mubr.f32.mxu0 0.0
        %492 = vmatmul.mubr.f32.gmra.mrb[0].mxu0 %v266
        %v493 = vpop.f32.mrb[0].mxu0
        %v494 = vadd.f32 %v318, %v493
        %v495 = vpop.f32.mrb[0].mxu0
        %v496 = vadd.f32 %v322, %v495
        %497 = vmatprep.mubr.f32.mxu0 0.0
        %498 = vmatmul.mubr.f32.gmra.mrb[0].mxu0 %v267
        %v499 = vpop.f32.mrb[0].mxu0
        %v500 = vadd.f32 %v318, %v499
        %v501 = vpop.f32.mrb[0].mxu0
        %v502 = vadd.f32 %v322, %v501
        %503 = vmatprep.mubr.f32.mxu0 0.0
        %504 = vmatmul.mubr.f32.gmra.mrb[0].mxu0 %v268
        %v505 = vpop.f32.mrb[0].mxu0
        %v506 = vadd.f32 %v318, %v505
        %v507 = vpop.f32.mrb[0].mxu0
        %v508 = vadd.f32 %v322, %v507
        %509 = vmatprep.mubr.f32.mxu0 0.0
        %510 = vmatmul.mubr.f32.gmra.mrb[0].mxu0 %v269
        %v511 = vpop.f32.mrb[0].mxu0
        %v512 = vadd.f32 %v318, %v511
        %v513 = vpop.f32.mrb[0].mxu0
        %v514 = vadd.f32 %v322, %v513
        %515 = vmatprep.mubr.f32.mxu0 0.0
        %516 = vmatmul.mubr.f32.gmra.mrb[0].mxu0 %v270
        %v517 = vpop.f32.mrb[0].mxu0
        %v518 = vadd.f32 %v318, %v517
        %v519 = vpop.f32.mrb[0].mxu0
        %v520 = vadd.f32 %v322, %v519
        %521 = vmatprep.mubr.f32.mxu0 0.0
        %522 = vmatmul.mubr.f32.gmra.mrb[0].mxu0 %v271
        %v523 = vpop.f32.mrb[0].mxu0
        %v524 = vadd.f32 %v318, %v523
        %v525 = vpop.f32.mrb[0].mxu0
        %v526 = vadd.f32 %v322, %v525
        %527 = vmatprep.mubr.f32.mxu0 0.0
        %528 = vmatmul.mubr.f32.gmra.mrb[0].mxu0 %v272
        %v529 = vpop.f32.mrb[0].mxu0
        %v530 = vadd.f32 %v318, %v529
        %v531 = vpop.f32.mrb[0].mxu0
        %v532 = vadd.f32 %v322, %v531
        %533 = vmatprep.mubr.f32.mxu0 0.0
        %534 = vmatmul.mubr.f32.gmra.mrb[0].mxu0 %v273
        %v535 = vpop.f32.mrb[0].mxu0
        %v536 = vadd.f32 %v318, %v535
        %v537 = vpop.f32.mrb[0].mxu0
        %v538 = vadd.f32 %v322, %v537
        %539 = vmatprep.mubr.f32.mxu0 0.0
        %540 = vmatmul.mubr.f32.gmra.mrb[0].mxu0 %v274
        %v541 = vpop.f32.mrb[0].mxu0
        %v542 = vadd.f32 %v318, %v541
        %v543 = vpop.f32.mrb[0].mxu0
        %v544 = vadd.f32 %v322, %v543
        %545 = vmatprep.mubr.f32.mxu0 0.0
        %546 = vmatmul.mubr.f32.gmra.mrb[0].mxu0 %v275
        %v547 = vpop.f32.mrb[0].mxu0
        %v548 = vadd.f32 %v318, %v547
        %v549 = vpop.f32.mrb[0].mxu0
        %v550 = vadd.f32 %v322, %v549
        %551 = vmatprep.mubr.f32.mxu0 0.0
        %552 = vmatmul.mubr.f32.gmra.mrb[0].mxu0 %v276
        %v553 = vpop.f32.mrb[0].mxu0
        %v554 = vadd.f32 %v318, %v553
        %v555 = vpop.f32.mrb[0].mxu0
        %v556 = vadd.f32 %v322, %v555
        %557 = vmatprep.mubr.f32.mxu0 0.0
        %558 = vmatmul.mubr.f32.gmra.mrb[0].mxu0 %v277
        %v559 = vpop.f32.mrb[0].mxu0
        %v560 = vadd.f32 %v318, %v559
        %v561 = vpop.f32.mrb[0].mxu0
        %v562 = vadd.f32 %v322, %v561
        %563 = vmatprep.mubr.f32.mxu0 0.0
        %564 = vmatmul.mubr.f32.gmra.mrb[0].mxu0 %v278
        %v565 = vpop.f32.mrb[0].mxu0
        %v566 = vadd.f32 %v318, %v565
        %v567 = vpop.f32.mrb[0].mxu0
        %v568 = vadd.f32 %v322, %v567
        %569 = vmatprep.mubr.f32.mxu0 0.0
        %570 = vmatmul.mubr.f32.gmra.mrb[0].mxu0 %v279
        %v571 = vpop.f32.mrb[0].mxu0
        %v572 = vadd.f32 %v318, %v571
        %v573 = vpop.f32.mrb[0].mxu0
        %v574 = vadd.f32 %v322, %v573
        %575 = vmatprep.mubr.f32.mxu0 0.0
        %576 = vmatmul.mubr.f32.gmra.mrb[0].mxu0 %v280
        %v577 = vpop.f32.mrb[0].mxu0
        %v578 = vadd.f32 %v318, %v577
        %v579 = vpop.f32.mrb[0].mxu0
        %v580 = vadd.f32 %v322, %v579
        %581 = vdwg.mxu0
        %582 = vst [vmem:[%s239] sm:$0xff] %v392
        %583 = vst [vmem:[%s239 + $0x8] sm:$0xff] %v394
        %584 = vst [vmem:[%s239 + $0x10] sm:$0xff] %v398
        %585 = vst [vmem:[%s239 + $0x18] sm:$0xff] %v400
        %586 = vst [vmem:[%s239 + $0x20] sm:$0xff] %v404
        %587 = vst [vmem:[%s239 + $0x28] sm:$0xff] %v406
        %588 = vst [vmem:[%s239 + $0x30] sm:$0xff] %v410
        %589 = vst [vmem:[%s239 + $0x38] sm:$0xff] %v412
        %590 = vst [vmem:[%s239 + $0x40] sm:$0xff] %v416
        %591 = vst [vmem:[%s239 + $0x48] sm:$0xff] %v418
        %592 = vst [vmem:[%s239 + $0x50] sm:$0xff] %v422
        %593 = vst [vmem:[%s239 + $0x58] sm:$0xff] %v424
        %594 = vst [vmem:[%s239 + $0x60] sm:$0xff] %v428
        %595 = vst [vmem:[%s239 + $0x68] sm:$0xff] %v430
        %596 = vst [vmem:[%s239 + $0x70] sm:$0xff] %v434
        %597 = vst [vmem:[%s239 + $0x78] sm:$0xff] %v436
        %598 = vst [vmem:[%s239 + $0x80] sm:$0xff] %v440
        %599 = vst [vmem:[%s239 + $0x88] sm:$0xff] %v442
        %600 = vst [vmem:[%s239 + $0x90] sm:$0xff] %v446
        %601 = vst [vmem:[%s239 + $0x98] sm:$0xff] %v448
        %602 = vst [vmem:[%s239 + $0xa0] sm:$0xff] %v452
        %603 = vst [vmem:[%s239 + $0xa8] sm:$0xff] %v454
        %604 = vst [vmem:[%s239 + $0xb0] sm:$0xff] %v458
        %605 = vst [vmem:[%s239 + $0xb8] sm:$0xff] %v460
        %606 = vst [vmem:[%s239 + $0xc0] sm:$0xff] %v464
        %607 = vst [vmem:[%s239 + $0xc8] sm:$0xff] %v466
        %608 = vst [vmem:[%s239 + $0xd0] sm:$0xff] %v470
        %609 = vst [vmem:[%s239 + $0xd8] sm:$0xff] %v472
        %610 = vst [vmem:[%s239 + $0xe0] sm:$0xff] %v476
        %611 = vst [vmem:[%s239 + $0xe8] sm:$0xff] %v478
        %612 = vst [vmem:[%s239 + $0xf0] sm:$0xff] %v482
        %613 = vst [vmem:[%s239 + $0xf8] sm:$0xff] %v484
        %614 = vst [vmem:[%s239 + $0x100] sm:$0xff] %v488
        %615 = vst [vmem:[%s239 + $0x108] sm:$0xff] %v490
        %616 = vst [vmem:[%s239 + $0x110] sm:$0xff] %v494
        %617 = vst [vmem:[%s239 + $0x118] sm:$0xff] %v496
        %618 = vst [vmem:[%s239 + $0x120] sm:$0xff] %v500
        %619 = vst [vmem:[%s239 + $0x128] sm:$0xff] %v502
        %620 = vst [vmem:[%s239 + $0x130] sm:$0xff] %v506
        %621 = vst [vmem:[%s239 + $0x138] sm:$0xff] %v508
        %622 = vst [vmem:[%s239 + $0x140] sm:$0xff] %v512
        %623 = vst [vmem:[%s239 + $0x148] sm:$0xff] %v514
        %624 = vst [vmem:[%s239 + $0x150] sm:$0xff] %v518
        %625 = vst [vmem:[%s239 + $0x158] sm:$0xff] %v520
        %626 = vst [vmem:[%s239 + $0x160] sm:$0xff] %v524
        %627 = vst [vmem:[%s239 + $0x168] sm:$0xff] %v526
        %628 = vst [vmem:[%s239 + $0x170] sm:$0xff] %v530
        %629 = vst [vmem:[%s239 + $0x178] sm:$0xff] %v532
        %630 = vst [vmem:[%s239 + $0x180] sm:$0xff] %v536
        %631 = vst [vmem:[%s239 + $0x188] sm:$0xff] %v538
        %632 = vst [vmem:[%s239 + $0x190] sm:$0xff] %v542
        %633 = vst [vmem:[%s239 + $0x198] sm:$0xff] %v544
        %634 = vst [vmem:[%s239 + $0x1a0] sm:$0xff] %v548
        %635 = vst [vmem:[%s239 + $0x1a8] sm:$0xff] %v550
        %636 = vst [vmem:[%s239 + $0x1b0] sm:$0xff] %v554
        %637 = vst [vmem:[%s239 + $0x1b8] sm:$0xff] %v556
        %638 = vst [vmem:[%s239 + $0x1c0] sm:$0xff] %v560
        %639 = vst [vmem:[%s239 + $0x1c8] sm:$0xff] %v562
        %640 = vst [vmem:[%s239 + $0x1d0] sm:$0xff] %v566
        %641 = vst [vmem:[%s239 + $0x1d8] sm:$0xff] %v568
        %642 = vst [vmem:[%s239 + $0x1e0] sm:$0xff] %v572
        %643 = vst [vmem:[%s239 + $0x1e8] sm:$0xff] %v574
        %644 = vst [vmem:[%s239 + $0x1f0] sm:$0xff] %v578
        %645 = vst [vmem:[%s239 + $0x1f8] sm:$0xff] %v580
        %s646 = sand.u32 %s121, 1
        %s647 = scalar_lea.sflag [#allocation4], %s646
        %s648 = sand.u32 %s121, 1
        %s649 = smul.addr %s648, 512
        %s650 = scalar_lea.vmem [#allocation7], %s649
        // Predicated region
        $region41: #{tpu_custom_call.1} parent=31 // pred_check
          %p651 = pneg %p131
        $region42: #{tpu_custom_call.1} parent=31 // pred_check_branch
          %653 = sbr.rel (%p651) target = $region44
        $region43: #{tpu_custom_call.1} parent=31 // pred_region
          %s654 = smul.u32 32, %s25
          %s655 = smul.u32 2, %s26
          %s657 = ssub.s32 8192, 8192
          %658 = vsyncadd %s647, %s657
          %s659 = smul.addr %s654, 2
          %s660 = sadd.s32 %s655, %s659
          %s661 = smul.addr %s660, 128
          %s662 = scalar_lea.hbm %s3, %s661
          %s663 = sshll.u32 %s650, 4
          %s664 = int_to_ptr.vmem [resolvable:$true] %s663
          %669 = dma.vmem_to_hbm [thread:$0]  %s664, 8192, %s662, %s647, 256, 256, 16
        $region44: #{tpu_custom_call.1} parent=31 // pred_fallthru
          _
      $region32: #{tpu_custom_call.1} parent=5 // pred_fallthru
        _
      %p670 = scmp.le.s32.totalorder 2, %s16
      // Predicated region
      $region45: #{tpu_custom_call.1} parent=5 // pred_check
        %p671 = pneg %p670
      $region46: #{tpu_custom_call.1} parent=5 // pred_check_branch
        %673 = sbr.rel (%p671) target = $region48
      $region47: #{tpu_custom_call.1} parent=5 // pred_region
        %s674 = ssub.s32 %s16, 2
        // Predicated region
        $region49: #{tpu_custom_call.1} parent=47 // pred_check
          %p675 = pneg %p137
        $region50: #{tpu_custom_call.1} parent=47 // pred_check_branch
          %677 = sbr.rel (%p675) target = $region52
        $region51: #{tpu_custom_call.1} parent=47 // pred_region
          %s678 = sand.u32 %s122, 1
          %s679 = scalar_lea.sflag [#allocation4], %s678
          %s680 = sand.u32 %s122, 1
          %s681 = smul.addr %s680, 512
          %s682 = scalar_lea.vmem [#allocation7], %s681
          %683 = dma.done %s679, 8192
        $region52: #{tpu_custom_call.1} parent=47 // pred_fallthru
          _
      $region48: #{tpu_custom_call.1} parent=5 // pred_fallthru
        _
    $region6: #{tpu_custom_call.1} parent=1 // loop_footer
      %s20 = sadd.s32 1, %s16
    $region7: #{tpu_custom_call.1} parent=1 // loop_footer_branch
      %15 = sbr.rel target = $region3
    $region8: #{tpu_custom_call.1} parent=1 // loop_exit
      _
    %684 = vsyncpa [#allocation3], 1
    %s685 = scalar_lea.sflag [#allocation3], 1
    %686 = vsyncpa %s685, 1
    %687 = vsyncpa [#allocation6], 1
    %688 = vsyncpa [#allocation4], 1
    %s689 = scalar_lea.sflag [#allocation4], 1
    %690 = vsyncpa %s689, 1

</llo_original>
